<compile_context>
chip_gen: v7x
topology: tpu7x:2x2x1
jax: 0.10.0
libtpu: 0.0.40
codegen_flags: <defaults>
</compile_context>

<pallas_src>
import functools

import jax
import jax.numpy as jnp
from jax.experimental import pallas as pl
from jax.experimental.pallas import tpu as pltpu

_NEG_INF = -1e30


def _round_up(x, m):
    return (x + m - 1) // m * m


def _make_emd_kernel(n_classes: int, quadratic: bool):
    def kernel(x_ref, t_ref, l_ref, o_ref):
        # x_ref: [TB, Cp] f32 logits   t_ref: [TB, 1] i32 labels
        # l_ref: [Cp, Cp] f32 upper-triangular ones (constant across grid)
        # o_ref: [TB, 1]  f32 per-sample loss
        x = x_ref[...]
        tb, cp = x.shape

        # Softmax over the class dim (all f32; reciprocal on the EUP slot).
        m = jnp.max(x, axis=-1, keepdims=True)
        e = jnp.exp(x - m)
        p = e * pl.reciprocal(jnp.sum(e, axis=-1, keepdims=True), approx=True)

        # CDF of the prediction via one MXU matmul: cumsum(p)[:, j] = (p @ L)[:, j].
        # TODO(synk): for very large C (>= ~2048 on v7x) switch to a blocked
        # cumsum (128/256-wide triangular blocks + running carry) so the dense
        # [C, C] matrix does not dominate the 64 MiB VMEM budget.
        cdf_p = jnp.dot(p, l_ref[...], preferred_element_type=jnp.float32)

        # Target CDF is a step function: cumsum(one_hot(y))[j] = (j >= y).
        col = jax.lax.broadcasted_iota(jnp.int32, (tb, cp), 1)
        cdf_t = (col >= t_ref[...]).astype(jnp.float32)

        cdf_diff = cdf_p - cdf_t
        # Zero the padded class columns so padding is exactly invisible.
        cdf_diff = jnp.where(col < n_classes, cdf_diff, 0.0)

        if quadratic:
            o_ref[...] = jnp.sum(cdf_diff * cdf_diff, axis=-1, keepdims=True)
        else:
            o_ref[...] = jnp.sum(jnp.abs(cdf_diff), axis=-1, keepdims=True)

    return kernel


@functools.partial(jax.jit, static_argnames=("reduction", "quadratic"))
def wasserstein_loss(logits, labels, *, reduction="mean", quadratic=True):
    """Pallas TPU forward of WassersteinLoss(n_classes)(logits, labels)."""
    if reduction not in (None, "mean", "sum"):
        raise ValueError('`reduction` must be None, "mean" or "sum"')
    B, C = logits.shape
    n_classes = C

    # ---- tiling / padding ---------------------------------------------------
    c_pad = _round_up(C, 128)                  # lane / MXU alignment
    tile_b = min(_round_up(B, 8), 256)         # sublane-aligned batch tile
    b_pad = _round_up(B, tile_b)

    x = logits.astype(jnp.float32)
    if c_pad > C:                              # dead classes get ~ -inf logits
        x = jnp.pad(x, ((0, 0), (0, c_pad - C)), constant_values=_NEG_INF)
    if b_pad > B:                              # dead rows are dropped later
        x = jnp.pad(x, ((0, b_pad - B), (0, 0)), constant_values=0.0)

    t = labels.astype(jnp.int32)
    if b_pad > B:
        t = jnp.pad(t, (0, b_pad - B), constant_values=0)
    t = t.reshape(b_pad, 1)

    # Upper-triangular ones: (p @ L)[:, j] = sum_{k<=j} p[:, k] = cumsum(p)[:, j].
    L = jnp.triu(jnp.ones((c_pad, c_pad), jnp.float32))

    # ---- VMEM budget (double-buffered logits tile + resident L) --------------
    vmem_need = 4 * (2 * tile_b * c_pad        # logits (2 buffers)
                     + 2 * c_pad * c_pad       # L (conservatively 2 buffers)
                     + 4 * tile_b              # labels + outputs
                     + 3 * tile_b * c_pad)     # in-kernel temporaries
    vmem_limit = int(min(64 * 2**20, max(32 * 2**20, 2 * vmem_need)))

    grid = (b_pad // tile_b,)
    per_sample = pl.pallas_call(
        _make_emd_kernel(n_classes, quadratic),
        out_shape=jax.ShapeDtypeStruct((b_pad, 1), jnp.float32),
        grid_spec=pltpu.PrefetchScalarGridSpec(
            num_scalar_prefetch=0,
            grid=grid,
            in_specs=[
                pl.BlockSpec((tile_b, c_pad), lambda i: (i, 0)),
                pl.BlockSpec((tile_b, 1), lambda i: (i, 0)),
                # Constant block index -> Pallas DMAs L only once.
                pl.BlockSpec((c_pad, c_pad), lambda i: (0, 0)),
            ],
            out_specs=pl.BlockSpec((tile_b, 1), lambda i: (i, 0)),
        ),
        compiler_params=pltpu.CompilerParams(
            dimension_semantics=("parallel",),
            vmem_limit_bytes=vmem_limit,
        ),
    )(x, t, L)

    losses = per_sample[:B, 0]
    if reduction == "mean":
        return jnp.mean(losses)
    if reduction == "sum":
        return jnp.sum(losses)
    return losses


# ---- pure-JAX reference (mirrors the PyTorch module) -------------------------
def _reference(logits, labels, n_classes, reduction="mean", quadratic=True):
    p = jax.nn.softmax(logits.astype(jnp.float32), axis=1)
    t = jax.nn.one_hot(labels, n_classes, dtype=jnp.float32)
    cdf_diff = jnp.cumsum(p, axis=1) - jnp.cumsum(t, axis=1)
    per = jnp.sum(jnp.abs(cdf_diff) ** (2 if quadratic else 1), axis=1)
    if reduction == "mean":
        return jnp.mean(per)
    if reduction == "sum":
        return jnp.sum(per)
    return per


if __name__ == "__main__":
    key = jax.random.PRNGKey(0)
    k1, k2 = jax.random.split(key)
    B, C = 6, 10   # small; exercises both batch (->8) and class (->128) padding
    logits = jax.random.normal(k1, (B, C), dtype=jnp.float32)
    labels = jax.random.randint(k2, (B,), 0, C, dtype=jnp.int32)

    # default path: mean reduction, quadratic distance
    loss = wasserstein_loss(logits, labels)
    jax.block_until_ready(loss)
    ref = _reference(logits, labels, C)
    assert jnp.allclose(loss, ref, atol=1e-3, rtol=1e-3), (loss, ref)

    # linear distance, sum reduction (same kernel path, different epilogue)
    loss2 = wasserstein_loss(logits, labels, reduction="sum", quadratic=False)
    jax.block_until_ready(loss2)
    ref2 = _reference(logits, labels, C, reduction="sum", quadratic=False)
    assert jnp.allclose(loss2, ref2, atol=1e-3, rtol=1e-3), (loss2, ref2)

    print("KERNEL_OK")
</pallas_src>

<mosaic_0001>
module attributes {stable_mosaic.version = 11 : i64} {
  func.func @kernel(%arg0: i32, %arg1: memref<8x128xf32, #tpu.memory_space<vmem>>, %arg2: memref<8x1xi32, #tpu.memory_space<vmem>>, %arg3: memref<128x128xf32, #tpu.memory_space<vmem>>, %arg4: memref<8x1xf32, #tpu.memory_space<vmem>>) attributes {dimension_semantics = [#tpu.dimension_semantics<parallel>], iteration_bounds = array<i64: 1>, scalar_prefetch = 0 : i64, scratch_operands = 0 : i64, tpu.core_type = #tpu.core_type<tc>, window_params = [{transform_indices = @transform_0, window_bounds = array<i64: 8, 128>}, {transform_indices = @transform_1, window_bounds = array<i64: 8, 1>}, {pipeline_mode = #tpu.pipeline_mode<synchronous>, transform_indices = @transform_2, window_bounds = array<i64: 128, 128>}, {transform_indices = @transform_3, window_bounds = array<i64: 8, 1>}]} {
    %c0 = arith.constant 0 : index
    %c0_0 = arith.constant 0 : index
    %0 = vector.load %arg1[%c0, %c0_0] : memref<8x128xf32, #tpu.memory_space<vmem>>, vector<8x128xf32>
    %cst = arith.constant dense<0xFF800000> : vector<8xf32>
    %1 = vector.multi_reduction <maximumf>, %0, %cst [1] : vector<8x128xf32> to vector<8xf32>
    %2 = vector.shape_cast %1 : vector<8xf32> to vector<8x1xf32>
    %3 = vector.broadcast %2 : vector<8x1xf32> to vector<8x128xf32>
    %4 = arith.subf %0, %3 : vector<8x128xf32>
    %5 = math.exp %4 : vector<8x128xf32>
    %cst_1 = arith.constant dense<0.000000e+00> : vector<8xf32>
    %6 = vector.multi_reduction <add>, %5, %cst_1 [1] : vector<8x128xf32> to vector<8xf32>
    %7 = vector.shape_cast %6 : vector<8xf32> to vector<8x1xf32>
    %8 = tpu.reciprocal %7 {approx = true} : vector<8x1xf32> -> vector<8x1xf32>
    %9 = vector.broadcast %8 : vector<8x1xf32> to vector<8x128xf32>
    %10 = arith.mulf %5, %9 : vector<8x128xf32>
    %c0_2 = arith.constant 0 : index
    %c0_3 = arith.constant 0 : index
    %11 = vector.load %arg3[%c0_2, %c0_3] : memref<128x128xf32, #tpu.memory_space<vmem>>, vector<128x128xf32>
    %cst_4 = arith.constant dense<0.000000e+00> : vector<8x128xf32>
    %12 = tpu.matmul %10, %11, %cst_4 {dimension_numbers = #tpu.dot_dimension_numbers<[1], [0], [0], [1], [0, 0, 1, 1], [], []>} : vector<8x128xf32>, vector<128x128xf32>, vector<8x128xf32> -> vector<8x128xf32>
    %13 = tpu.iota {dimensions = array<i32: 1>} : vector<8x128xi32>
    %c0_5 = arith.constant 0 : index
    %c0_6 = arith.constant 0 : index
    %14 = vector.load %arg2[%c0_5, %c0_6] : memref<8x1xi32, #tpu.memory_space<vmem>>, vector<8x1xi32>
    %15 = vector.broadcast %14 : vector<8x1xi32> to vector<8x128xi32>
    %16 = arith.cmpi sge, %13, %15 : vector<8x128xi32>
    %17 = arith.extui %16 : vector<8x128xi1> to vector<8x128xi32>
    %18 = arith.sitofp %17 : vector<8x128xi32> to vector<8x128xf32>
    %19 = arith.subf %12, %18 : vector<8x128xf32>
    %c10_i32 = arith.constant 10 : i32
    %20 = vector.broadcast %c10_i32 : i32 to vector<8x128xi32>
    %21 = arith.cmpi slt, %13, %20 : vector<8x128xi32>
    %cst_7 = arith.constant 0.000000e+00 : f32
    %22 = vector.broadcast %cst_7 : f32 to vector<8x128xf32>
    %23 = arith.select %21, %19, %22 : vector<8x128xi1>, vector<8x128xf32>
    %24 = arith.mulf %23, %23 : vector<8x128xf32>
    %cst_8 = arith.constant dense<0.000000e+00> : vector<8xf32>
    %25 = vector.multi_reduction <add>, %24, %cst_8 [1] : vector<8x128xf32> to vector<8xf32>
    %26 = vector.shape_cast %25 : vector<8xf32> to vector<8x1xf32>
    %c0_9 = arith.constant 0 : index
    %c0_10 = arith.constant 0 : index
    %27 = vector.load %arg4[%c0_9, %c0_10] : memref<8x1xf32, #tpu.memory_space<vmem>>, vector<8x1xf32>
    tpu.vector_store %arg4[%c0_9, %c0_10], %26 {strides = array<i32>} : memref<8x1xf32, #tpu.memory_space<vmem>>, vector<8x1xf32>,
    return
  }
  func.func @transform_0(%arg0: i32) -> (i32, i32) {
    %c0_i32 = arith.constant 0 : i32
    %c0_i32_0 = arith.constant 0 : i32
    return %arg0, %c0_i32 : i32, i32
  }
  func.func @transform_1(%arg0: i32) -> (i32, i32) {
    %c0_i32 = arith.constant 0 : i32
    %c0_i32_0 = arith.constant 0 : i32
    return %arg0, %c0_i32 : i32, i32
  }
  func.func @transform_2(%arg0: i32) -> (i32, i32) {
    %c0_i32 = arith.constant 0 : i32
    %c0_i32_0 = arith.constant 0 : i32
    %c0_i32_1 = arith.constant 0 : i32
    return %c0_i32, %c0_i32_0 : i32, i32
  }
  func.func @transform_3(%arg0: i32) -> (i32, i32) {
    %c0_i32 = arith.constant 0 : i32
    %c0_i32_0 = arith.constant 0 : i32
    return %arg0, %c0_i32 : i32, i32
  }
}

</mosaic_0001>

<llo_original>
// kernel: wasserstein_loss.1
$region0: #{wasserstein_loss.1}
  #allocation0 [shape = 'u32[]', space=smem, size = 0x4, offset = 0x4, fixed_abs, tag = 'smem constant byte address 0x4 - core index']
  #allocation1 [shape = 'u32[144,128]{1,0:T(1,128)}', space=vmem, size = 0x12000, scoped, tag = 'internal scratch']
  %s0 = inlined_call_operand.vmem [shape: f32[8,128], index: 0, kind: input, shape index: {}]
  %s1 = inlined_call_operand.vmem [shape: s32[8,1], index: 1, kind: input, shape index: {}]
  %s2 = inlined_call_operand.vmem [shape: f32[128,128], index: 2, kind: input, shape index: {}]
  %s3 = inlined_call_operand.vmem [shape: f32[8,1], index: 3, kind: output, shape index: {}]
  %s4 = sld [smem:[#allocation0]]
  $region22: #{wasserstein_loss.1} parent=0
    _
  %s6 = ssub.s32 1, %s4
  %s7 = scalar_select 0, %s6, %s4
  // Predicated region
  $region2: #{wasserstein_loss.1} parent=0 // pred_check
    _
  $region3: #{wasserstein_loss.1} parent=0 // pred_check_branch
    %9 = sbr.rel (0) target = $region5
  $region4: #{wasserstein_loss.1} parent=0 // pred_region
    _
  $region5: #{wasserstein_loss.1} parent=0 // pred_fallthru
    _
  // Predicated region
  $region6: #{wasserstein_loss.1} parent=0 // pred_check
    _
  $region7: #{wasserstein_loss.1} parent=0 // pred_check_branch
    %11 = sbr.rel (0) target = $region9
  $region8: #{wasserstein_loss.1} parent=0 // pred_region
    _
  $region9: #{wasserstein_loss.1} parent=0 // pred_fallthru
    _
  // Predicated region
  $region10: #{wasserstein_loss.1} parent=0 // pred_check
    _
  $region11: #{wasserstein_loss.1} parent=0 // pred_check_branch
    %13 = sbr.rel (0) target = $region13
  $region12: #{wasserstein_loss.1} parent=0 // pred_region
    _
  $region13: #{wasserstein_loss.1} parent=0 // pred_fallthru
    _
  %v14 = vld [vmem:[%s0] sm:$0xff]
  %15 = vmax.xlane.f32.xlu0 %v14
  %v16 = vpop.xlane.xlu0 %15
  %v17 = vsub.f32 %v14, %v16
  %v18 = vmul.f32 %v17, 1.442695
  %v19 = vpow.pop %v18
  %20 = vadd.xlane.f32.xlu0 %v19
  %v21 = vpop.xlane.xlu0 %20
  %v22 = vrcp.pop %v21
  %v23 = vmul.f32 %v19, %v22
  %v24 = vld [vmem:[%s2] sm:$0xff]
  %v25 = vld [vmem:[%s2 + $0x8] sm:$0xff]
  %v26 = vld [vmem:[%s2 + $0x10] sm:$0xff]
  %v27 = vld [vmem:[%s2 + $0x18] sm:$0xff]
  %v28 = vld [vmem:[%s2 + $0x20] sm:$0xff]
  %v29 = vld [vmem:[%s2 + $0x28] sm:$0xff]
  %v30 = vld [vmem:[%s2 + $0x30] sm:$0xff]
  %v31 = vld [vmem:[%s2 + $0x38] sm:$0xff]
  %v32 = vld [vmem:[%s2 + $0x40] sm:$0xff]
  %v33 = vld [vmem:[%s2 + $0x48] sm:$0xff]
  %v34 = vld [vmem:[%s2 + $0x50] sm:$0xff]
  %v35 = vld [vmem:[%s2 + $0x58] sm:$0xff]
  %v36 = vld [vmem:[%s2 + $0x60] sm:$0xff]
  %v37 = vld [vmem:[%s2 + $0x68] sm:$0xff]
  %v38 = vld [vmem:[%s2 + $0x70] sm:$0xff]
  %v39 = vld [vmem:[%s2 + $0x78] sm:$0xff]
  %40 = vmatprep.subr.mxu0 0.0
  %41 = vmatpush1.msra.mxu0 %v24
  %42 = vmatprep.subr.mxu0 0.0
  %43 = vmatpush1.msra.mxu0 %v25
  %44 = vmatprep.subr.mxu0 0.0
  %45 = vmatpush1.msra.mxu0 %v26
  %46 = vmatprep.subr.mxu0 0.0
  %47 = vmatpush1.msra.mxu0 %v27
  %48 = vmatprep.subr.mxu0 0.0
  %49 = vmatpush1.msra.mxu0 %v28
  %50 = vmatprep.subr.mxu0 0.0
  %51 = vmatpush1.msra.mxu0 %v29
  %52 = vmatprep.subr.mxu0 0.0
  %53 = vmatpush1.msra.mxu0 %v30
  %54 = vmatprep.subr.mxu0 0.0
  %55 = vmatpush1.msra.mxu0 %v31
  %56 = vmatprep.subr.mxu0 0.0
  %57 = vmatpush1.msra.mxu0 %v32
  %58 = vmatprep.subr.mxu0 0.0
  %59 = vmatpush1.msra.mxu0 %v33
  %60 = vmatprep.subr.mxu0 0.0
  %61 = vmatpush1.msra.mxu0 %v34
  %62 = vmatprep.subr.mxu0 0.0
  %63 = vmatpush1.msra.mxu0 %v35
  %64 = vmatprep.subr.mxu0 0.0
  %65 = vmatpush1.msra.mxu0 %v36
  %66 = vmatprep.subr.mxu0 0.0
  %67 = vmatpush1.msra.mxu0 %v37
  %68 = vmatprep.subr.mxu0 0.0
  %69 = vmatpush1.msra.mxu0 %v38
  %70 = vmatprep.subr.mxu0 0.0
  %71 = vmatpush1.msra.mxu0 %v39
  %72 = vmatprep.subr.mxu0 0.0
  %73 = vmatpush1.msra.mxu0 0.0
  %74 = vmatprep.subr.mxu0 0.0
  %75 = vmatpush1.msra.mxu0 0.0
  %76 = vmatprep.subr.mxu0 0.0
  %77 = vmatpush1.msra.mxu0 0.0
  %78 = vmatprep.subr.mxu0 0.0
  %79 = vmatpush1.msra.mxu0 0.0
  %80 = vmatprep.subr.mxu0 0.0
  %81 = vmatpush1.msra.mxu0 0.0
  %82 = vmatprep.subr.mxu0 0.0
  %83 = vmatpush1.msra.mxu0 0.0
  %84 = vmatprep.subr.mxu0 0.0
  %85 = vmatpush1.msra.mxu0 0.0
  %86 = vmatprep.subr.mxu0 0.0
  %87 = vmatpush1.msra.mxu0 0.0
  %88 = vmatprep.subr.mxu0 0.0
  %89 = vmatpush1.msra.mxu0 0.0
  %90 = vmatprep.subr.mxu0 0.0
  %91 = vmatpush1.msra.mxu0 0.0
  %92 = vmatprep.subr.mxu0 0.0
  %93 = vmatpush1.msra.mxu0 0.0
  %94 = vmatprep.subr.mxu0 0.0
  %95 = vmatpush1.msra.mxu0 0.0
  %96 = vmatprep.subr.mxu0 0.0
  %97 = vmatpush1.msra.mxu0 0.0
  %98 = vmatprep.subr.mxu0 0.0
  %99 = vmatpush1.msra.mxu0 0.0
  %100 = vmatprep.subr.mxu0 0.0
  %101 = vmatpush1.msra.mxu0 0.0
  %102 = vmatprep.subr.mxu0 0.0
  %103 = vmatpush1.msra.mxu0 0.0
  %104 = vmatprep.mubr.f32.mxu0 0.0
  %105 = vmatmul.mubr.f32.gmra.mrb[0].mxu0 %v23
  %v106 = vpop.f32.mrb[0].mxu0
  %v107 = vadd.f32 0.0, %v106
  %v108 = vpop.f32.mrb[0].mxu0
  %109 = vdwg.mxu0
  %v110 = vlaneseq
  %v111 = vand.u32 %v110, 127
  %v112 = vld [vmem:[%s1] sm:$0xff]
  %113 = vset.pattern.permute.xlu0 0
  %114 = vperm.xlu0 %113, %v112
  %v115 = vpop.permute.xlu0 %114
  %vm116 = vcmp.ge.s32.totalorder %v111, %v115
  %v117 = vsel %vm116, 1, 0
  %v118 = vcvt.s32.f32 %v117
  %v119 = vsub.f32 %v107, %v118
  %vm120 = vcmp.lt.s32.totalorder %v111, 10
  %v121 = vsel %vm120, %v119, 0.0
  %v122 = vmul.f32 %v121, %v121
  %123 = vadd.xlane.f32.xlu0 %v122
  %v124 = vpop.xlane.xlu0 %123
  %vm125 = vcmask 7168
  %126 = vst.msk [vmem:[%s3] sm:$0xff] %vm125, %v124
  // Predicated region
  $region14: #{wasserstein_loss.1} parent=0 // pred_check
    _
  $region15: #{wasserstein_loss.1} parent=0 // pred_check_branch
    %128 = sbr.rel (0) target = $region17
  $region16: #{wasserstein_loss.1} parent=0 // pred_region
    _
  $region17: #{wasserstein_loss.1} parent=0 // pred_fallthru
    _
  // Predicated region
  $region18: #{wasserstein_loss.1} parent=0 // pred_check
    _
  $region19: #{wasserstein_loss.1} parent=0 // pred_check_branch
    %130 = sbr.rel (0) target = $region21
  $region20: #{wasserstein_loss.1} parent=0 // pred_region
    _
  $region21: #{wasserstein_loss.1} parent=0 // pred_fallthru
    _

</llo_original>
